<compile_context>
chip_gen: v5e
topology: v5e:2x2
jax: 0.10.0
libtpu: 0.0.40
codegen_flags: <defaults>
</compile_context>

<pallas_src>
import functools

import jax
import jax.numpy as jnp
from jax.experimental import pallas as pl
from jax.experimental.pallas import tpu as pltpu


def _round_up(n, m):
    return ((n + m - 1) // m) * m


def dqn_kernel(x_ref, w1_ref, b1_ref, w2_ref, b2_ref, w3_ref, b3_ref, o_ref):
    # One batch tile per grid step. Three MXU matmuls with bf16 operands and f32
    # accumulation; bias adds + ReLU run on the VPU in f32 (safe on v5e).
    x = x_ref[...]                                                        # (tm, n_obs) bf16
    h1 = jnp.dot(x, w1_ref[...], preferred_element_type=jnp.float32) + b1_ref[...]
    h1 = jnp.maximum(h1, 0.0).astype(jnp.bfloat16)
    h2 = jnp.dot(h1, w2_ref[...], preferred_element_type=jnp.float32) + b2_ref[...]
    h2 = jnp.maximum(h2, 0.0).astype(jnp.bfloat16)
    out = jnp.dot(h2, w3_ref[...], preferred_element_type=jnp.float32) + b3_ref[...]
    o_ref[...] = out.astype(o_ref.dtype)                                  # (tm, 128) lane-dense


@functools.partial(jax.jit, static_argnames=("block_rows",))
def dqn_forward(x, params, *, block_rows=2048):
    """Batched DQN forward. Streams row tiles of x; weights stay VMEM-resident."""
    w1, b1, w2, b2, w3, b3 = params
    batch, n_obs = x.shape
    hidden = w1.shape[1]
    n_actions = w3.shape[1]
    n_out = _round_up(n_actions, 128)   # lane-dense output columns (>= 128)

    # Row tile: multiple of 8 (sublane granule), large to amortize the ~0.35 us
    # per-step pipeline overhead, but capped at ceil(batch/2) so the grid has at
    # least two steps whenever batch > 8 (lets v7x split the "parallel" axis
    # across its two TensorCores; no-op on v5e/v6e). Sweep block_rows 1024-4096
    # for big replay batches.
    tm = min(_round_up(block_rows, 8), _round_up(pl.cdiv(batch, 2), 8))
    tm = max(tm, 8)
    grid = (pl.cdiv(batch, tm),)   # ragged last block handled by Pallas masking

    # bf16 MXU operands; biases stay f32 (added to the f32 accumulator).
    x_bf = x.astype(jnp.bfloat16)
    w1_bf = w1.astype(jnp.bfloat16)
    w2_bf = w2.astype(jnp.bfloat16)
    # Zero-pad layer-3 weights/bias to 128 output columns -> lane-dense output slab.
    w3_bf = jnp.zeros((hidden, n_out), jnp.bfloat16).at[:, :n_actions].set(
        w3.astype(jnp.bfloat16))
    b3_p = jnp.zeros((1, n_out), jnp.float32).at[:, :n_actions].set(b3)

    flops = 2 * batch * (n_obs * hidden + hidden * hidden + hidden * n_out)
    bytes_accessed = (
        2 * batch * n_obs                                              # x (bf16)
        + 2 * (n_obs * hidden + hidden * hidden + hidden * n_out)      # weights (bf16)
        + 4 * (2 * hidden + n_out)                                     # biases (f32)
        + 4 * batch * n_out                                            # output (f32)
    )

    # Weights/biases: index_map always returns block (0, 0) -> DMA'd once and held
    # resident in VMEM across every grid step; only x / out stream.
    # TODO(synk): on v7x with hidden >> 128, mark the six weight/bias BlockSpecs
    #             pipeline_mode=pl.Buffered(1) so constant-index blocks aren't
    #             double-buffered in the halved 64 MiB VMEM (trivial ~134 KB here).
    out = pl.pallas_call(
        dqn_kernel,
        out_shape=jax.ShapeDtypeStruct((batch, n_out), jnp.float32),
        grid_spec=pltpu.PrefetchScalarGridSpec(
            num_scalar_prefetch=0,
            grid=grid,
            in_specs=[
                pl.BlockSpec((tm, n_obs), lambda i: (i, 0)),          # x tile (streams)
                pl.BlockSpec((n_obs, hidden), lambda i: (0, 0)),      # w1 (resident)
                pl.BlockSpec((1, hidden), lambda i: (0, 0)),          # b1
                pl.BlockSpec((hidden, hidden), lambda i: (0, 0)),     # w2
                pl.BlockSpec((1, hidden), lambda i: (0, 0)),          # b2
                pl.BlockSpec((hidden, n_out), lambda i: (0, 0)),      # w3 (col-padded)
                pl.BlockSpec((1, n_out), lambda i: (0, 0)),           # b3 (col-padded)
            ],
            out_specs=pl.BlockSpec((tm, n_out), lambda i: (i, 0)),
        ),
        compiler_params=pltpu.CompilerParams(
            dimension_semantics=("parallel",),   # batch tiles independent -> both TCs on v7x
            # x tile is lane-padded to (tm,128) in VMEM; at tm=4096 the x/out double
            # buffers + h1/h2 intermediates exceed v5e's 16 MiB scoped default, so
            # raise the limit explicitly (48 MiB fits every generation's VMEM).
            vmem_limit_bytes=48 * 1024 * 1024,
        ),
        cost_estimate=pl.CostEstimate(
            flops=flops, transcendentals=0, bytes_accessed=bytes_accessed
        ),
    )(x_bf, w1_bf, b1, w2_bf, b2, w3_bf, b3_p)
    return out[:, :n_actions]


def init_dqn_params(key, n_observations, n_actions, hidden=128):
    """Deterministic init mimicking PyTorch nn.Linear default (U[-1/sqrt(fan_in), 1/sqrt(fan_in)])."""
    keys = jax.random.split(key, 6)

    def linear(kw, kb, fan_in, fan_out):
        bound = 1.0 / jnp.sqrt(jnp.float32(fan_in))
        w = jax.random.uniform(kw, (fan_in, fan_out), jnp.float32, -bound, bound)
        b = jax.random.uniform(kb, (1, fan_out), jnp.float32, -bound, bound)
        return w, b

    w1, b1 = linear(keys[0], keys[1], n_observations, hidden)
    w2, b2 = linear(keys[2], keys[3], hidden, hidden)
    w3, b3 = linear(keys[4], keys[5], hidden, n_actions)
    return (w1, b1, w2, b2, w3, b3)


def dqn_reference(x, params):
    w1, b1, w2, b2, w3, b3 = params
    h1 = jnp.maximum(x @ w1 + b1, 0.0)
    h2 = jnp.maximum(h1 @ w2 + b2, 0.0)
    return h2 @ w3 + b3


if __name__ == "__main__":
    n_observations = 4   # e.g. CartPole observation size
    n_actions = 2

    key = jax.random.PRNGKey(0)
    k_x, k_x2, k_p = jax.random.split(key, 3)
    params = init_dqn_params(k_p, n_observations, n_actions)

    # Small single-tile case (batch=8 -> tm=8, grid=(1,)).
    x_small = jax.random.normal(k_x, (8, n_observations), jnp.float32)
    out_small = jax.block_until_ready(dqn_forward(x_small, params))
    ref_small = dqn_reference(x_small, params)
    assert out_small.shape == (8, n_actions)
    # bf16 MXU operands vs f32 reference -> relaxed tolerance.
    assert jnp.allclose(out_small, ref_small, atol=3e-2, rtol=3e-2), "mismatch (small batch)"

    # Multi-tile case, no pre-padding (batch=300 -> tm=152, grid=(2,), ragged tail masked).
    x_big = jax.random.normal(k_x2, (300, n_observations), jnp.float32)
    out_big = jax.block_until_ready(dqn_forward(x_big, params, block_rows=2048))
    ref_big = dqn_reference(x_big, params)
    assert out_big.shape == (300, n_actions)
    assert jnp.allclose(out_big, ref_big, atol=3e-2, rtol=3e-2), "mismatch (gridded batch)"

    print("KERNEL_OK")
</pallas_src>

<mosaic_0001>
module attributes {stable_mosaic.version = 11 : i64} {
  func.func @dqn_kernel(%arg0: i32, %arg1: memref<8x4xbf16, #tpu.memory_space<vmem>>, %arg2: memref<4x128xbf16, #tpu.memory_space<vmem>>, %arg3: memref<1x128xf32, #tpu.memory_space<vmem>>, %arg4: memref<128x128xbf16, #tpu.memory_space<vmem>>, %arg5: memref<1x128xf32, #tpu.memory_space<vmem>>, %arg6: memref<128x128xbf16, #tpu.memory_space<vmem>>, %arg7: memref<1x128xf32, #tpu.memory_space<vmem>>, %arg8: memref<8x128xf32, #tpu.memory_space<vmem>>) attributes {dimension_semantics = [#tpu.dimension_semantics<parallel>], iteration_bounds = array<i64: 1>, scalar_prefetch = 0 : i64, scratch_operands = 0 : i64, tpu.core_type = #tpu.core_type<tc>, window_params = [{transform_indices = @transform_0, window_bounds = array<i64: 8, 4>}, {pipeline_mode = #tpu.pipeline_mode<synchronous>, transform_indices = @transform_1, window_bounds = array<i64: 4, 128>}, {pipeline_mode = #tpu.pipeline_mode<synchronous>, transform_indices = @transform_2, window_bounds = array<i64: 1, 128>}, {pipeline_mode = #tpu.pipeline_mode<synchronous>, transform_indices = @transform_3, window_bounds = array<i64: 128, 128>}, {pipeline_mode = #tpu.pipeline_mode<synchronous>, transform_indices = @transform_4, window_bounds = array<i64: 1, 128>}, {pipeline_mode = #tpu.pipeline_mode<synchronous>, transform_indices = @transform_5, window_bounds = array<i64: 128, 128>}, {pipeline_mode = #tpu.pipeline_mode<synchronous>, transform_indices = @transform_6, window_bounds = array<i64: 1, 128>}, {transform_indices = @transform_7, window_bounds = array<i64: 8, 128>}]} {
    %c0 = arith.constant 0 : index
    %c0_0 = arith.constant 0 : index
    %0 = vector.load %arg1[%c0, %c0_0] : memref<8x4xbf16, #tpu.memory_space<vmem>>, vector<8x4xbf16>
    %c0_1 = arith.constant 0 : index
    %c0_2 = arith.constant 0 : index
    %1 = vector.load %arg2[%c0_1, %c0_2] : memref<4x128xbf16, #tpu.memory_space<vmem>>, vector<4x128xbf16>
    %cst = arith.constant dense<0.000000e+00> : vector<8x128xf32>
    %2 = tpu.matmul %0, %1, %cst {dimension_numbers = #tpu.dot_dimension_numbers<[1], [0], [0], [1], [0, 0, 1, 1], [], []>} : vector<8x4xbf16>, vector<4x128xbf16>, vector<8x128xf32> -> vector<8x128xf32>
    %c0_3 = arith.constant 0 : index
    %c0_4 = arith.constant 0 : index
    %3 = vector.load %arg3[%c0_3, %c0_4] : memref<1x128xf32, #tpu.memory_space<vmem>>, vector<1x128xf32>
    %4 = vector.broadcast %3 : vector<1x128xf32> to vector<8x128xf32>
    %5 = arith.addf %2, %4 : vector<8x128xf32>
    %cst_5 = arith.constant 0.000000e+00 : f32
    %6 = vector.broadcast %cst_5 : f32 to vector<8x128xf32>
    %7 = arith.maximumf %5, %6 : vector<8x128xf32>
    %8 = arith.truncf %7 : vector<8x128xf32> to vector<8x128xbf16>
    %c0_6 = arith.constant 0 : index
    %c0_7 = arith.constant 0 : index
    %9 = vector.load %arg4[%c0_6, %c0_7] : memref<128x128xbf16, #tpu.memory_space<vmem>>, vector<128x128xbf16>
    %cst_8 = arith.constant dense<0.000000e+00> : vector<8x128xf32>
    %10 = tpu.matmul %8, %9, %cst_8 {dimension_numbers = #tpu.dot_dimension_numbers<[1], [0], [0], [1], [0, 0, 1, 1], [], []>} : vector<8x128xbf16>, vector<128x128xbf16>, vector<8x128xf32> -> vector<8x128xf32>
    %c0_9 = arith.constant 0 : index
    %c0_10 = arith.constant 0 : index
    %11 = vector.load %arg5[%c0_9, %c0_10] : memref<1x128xf32, #tpu.memory_space<vmem>>, vector<1x128xf32>
    %12 = vector.broadcast %11 : vector<1x128xf32> to vector<8x128xf32>
    %13 = arith.addf %10, %12 : vector<8x128xf32>
    %cst_11 = arith.constant 0.000000e+00 : f32
    %14 = vector.broadcast %cst_11 : f32 to vector<8x128xf32>
    %15 = arith.maximumf %13, %14 : vector<8x128xf32>
    %16 = arith.truncf %15 : vector<8x128xf32> to vector<8x128xbf16>
    %c0_12 = arith.constant 0 : index
    %c0_13 = arith.constant 0 : index
    %17 = vector.load %arg6[%c0_12, %c0_13] : memref<128x128xbf16, #tpu.memory_space<vmem>>, vector<128x128xbf16>
    %cst_14 = arith.constant dense<0.000000e+00> : vector<8x128xf32>
    %18 = tpu.matmul %16, %17, %cst_14 {dimension_numbers = #tpu.dot_dimension_numbers<[1], [0], [0], [1], [0, 0, 1, 1], [], []>} : vector<8x128xbf16>, vector<128x128xbf16>, vector<8x128xf32> -> vector<8x128xf32>
    %c0_15 = arith.constant 0 : index
    %c0_16 = arith.constant 0 : index
    %19 = vector.load %arg7[%c0_15, %c0_16] : memref<1x128xf32, #tpu.memory_space<vmem>>, vector<1x128xf32>
    %20 = vector.broadcast %19 : vector<1x128xf32> to vector<8x128xf32>
    %21 = arith.addf %18, %20 : vector<8x128xf32>
    %c0_17 = arith.constant 0 : index
    %c0_18 = arith.constant 0 : index
    %22 = vector.load %arg8[%c0_17, %c0_18] : memref<8x128xf32, #tpu.memory_space<vmem>>, vector<8x128xf32>
    tpu.vector_store %arg8[%c0_17, %c0_18], %21 {strides = array<i32>} : memref<8x128xf32, #tpu.memory_space<vmem>>, vector<8x128xf32>,
    return
  }
  func.func @transform_0(%arg0: i32) -> (i32, i32) {
    %c0_i32 = arith.constant 0 : i32
    %c0_i32_0 = arith.constant 0 : i32
    return %arg0, %c0_i32 : i32, i32
  }
  func.func @transform_1(%arg0: i32) -> (i32, i32) {
    %c0_i32 = arith.constant 0 : i32
    %c0_i32_0 = arith.constant 0 : i32
    %c0_i32_1 = arith.constant 0 : i32
    return %c0_i32, %c0_i32_0 : i32, i32
  }
  func.func @transform_2(%arg0: i32) -> (i32, i32) {
    %c0_i32 = arith.constant 0 : i32
    %c0_i32_0 = arith.constant 0 : i32
    %c0_i32_1 = arith.constant 0 : i32
    return %c0_i32, %c0_i32_0 : i32, i32
  }
  func.func @transform_3(%arg0: i32) -> (i32, i32) {
    %c0_i32 = arith.constant 0 : i32
    %c0_i32_0 = arith.constant 0 : i32
    %c0_i32_1 = arith.constant 0 : i32
    return %c0_i32, %c0_i32_0 : i32, i32
  }
  func.func @transform_4(%arg0: i32) -> (i32, i32) {
    %c0_i32 = arith.constant 0 : i32
    %c0_i32_0 = arith.constant 0 : i32
    %c0_i32_1 = arith.constant 0 : i32
    return %c0_i32, %c0_i32_0 : i32, i32
  }
  func.func @transform_5(%arg0: i32) -> (i32, i32) {
    %c0_i32 = arith.constant 0 : i32
    %c0_i32_0 = arith.constant 0 : i32
    %c0_i32_1 = arith.constant 0 : i32
    return %c0_i32, %c0_i32_0 : i32, i32
  }
  func.func @transform_6(%arg0: i32) -> (i32, i32) {
    %c0_i32 = arith.constant 0 : i32
    %c0_i32_0 = arith.constant 0 : i32
    %c0_i32_1 = arith.constant 0 : i32
    return %c0_i32, %c0_i32_0 : i32, i32
  }
  func.func @transform_7(%arg0: i32) -> (i32, i32) {
    %c0_i32 = arith.constant 0 : i32
    %c0_i32_0 = arith.constant 0 : i32
    return %arg0, %c0_i32 : i32, i32
  }
}

</mosaic_0001>

<llo_original>
// kernel: dqn_forward.1
$region0: #{dqn_forward.1}
  #allocation0 [shape = 'u32[]', space=smem, size = 0x4, offset = 0x4, fixed_abs, tag = 'smem constant byte address 0x4 - core index']
  #allocation1 [shape = 'u32[72,128]{1,0:T(1,128)}', space=vmem, size = 0x9000, scoped, tag = 'internal scratch']
  %s0 = inlined_call_operand.vmem [shape: bf16[8,4], index: 0, kind: input, shape index: {}]
  %s1 = inlined_call_operand.vmem [shape: bf16[4,128], index: 1, kind: input, shape index: {}]
  %s2 = inlined_call_operand.vmem [shape: f32[1,128], index: 2, kind: input, shape index: {}]
  %s3 = inlined_call_operand.vmem [shape: bf16[128,128], index: 3, kind: input, shape index: {}]
  %s4 = inlined_call_operand.vmem [shape: f32[1,128], index: 4, kind: input, shape index: {}]
  %s5 = inlined_call_operand.vmem [shape: bf16[128,128], index: 5, kind: input, shape index: {}]
  %s6 = inlined_call_operand.vmem [shape: f32[1,128], index: 6, kind: input, shape index: {}]
  %s7 = inlined_call_operand.vmem [shape: f32[8,128], index: 7, kind: output, shape index: {}]
  %s8 = sld [smem:[#allocation0]]
  $region38: #{dqn_forward.1} parent=0
    _
  %s10 = ssub.s32 1, %s8
  %s11 = scalar_select 0, %s10, %s8
  // Predicated region
  $region2: #{dqn_forward.1} parent=0 // pred_check
    _
  $region3: #{dqn_forward.1} parent=0 // pred_check_branch
    %13 = sbr.rel (0) target = $region5
  $region4: #{dqn_forward.1} parent=0 // pred_region
    _
  $region5: #{dqn_forward.1} parent=0 // pred_fallthru
    _
  // Predicated region
  $region6: #{dqn_forward.1} parent=0 // pred_check
    _
  $region7: #{dqn_forward.1} parent=0 // pred_check_branch
    %15 = sbr.rel (0) target = $region9
  $region8: #{dqn_forward.1} parent=0 // pred_region
    _
  $region9: #{dqn_forward.1} parent=0 // pred_fallthru
    _
  // Predicated region
  $region10: #{dqn_forward.1} parent=0 // pred_check
    _
  $region11: #{dqn_forward.1} parent=0 // pred_check_branch
    %17 = sbr.rel (0) target = $region13
  $region12: #{dqn_forward.1} parent=0 // pred_region
    _
  $region13: #{dqn_forward.1} parent=0 // pred_fallthru
    _
  // Predicated region
  $region14: #{dqn_forward.1} parent=0 // pred_check
    _
  $region15: #{dqn_forward.1} parent=0 // pred_check_branch
    %19 = sbr.rel (0) target = $region17
  $region16: #{dqn_forward.1} parent=0 // pred_region
    _
  $region17: #{dqn_forward.1} parent=0 // pred_fallthru
    _
  // Predicated region
  $region18: #{dqn_forward.1} parent=0 // pred_check
    _
  $region19: #{dqn_forward.1} parent=0 // pred_check_branch
    %21 = sbr.rel (0) target = $region21
  $region20: #{dqn_forward.1} parent=0 // pred_region
    _
  $region21: #{dqn_forward.1} parent=0 // pred_fallthru
    _
  // Predicated region
  $region22: #{dqn_forward.1} parent=0 // pred_check
    _
  $region23: #{dqn_forward.1} parent=0 // pred_check_branch
    %23 = sbr.rel (0) target = $region25
  $region24: #{dqn_forward.1} parent=0 // pred_region
    _
  $region25: #{dqn_forward.1} parent=0 // pred_fallthru
    _
  // Predicated region
  $region26: #{dqn_forward.1} parent=0 // pred_check
    _
  $region27: #{dqn_forward.1} parent=0 // pred_check_branch
    %25 = sbr.rel (0) target = $region29
  $region28: #{dqn_forward.1} parent=0 // pred_region
    _
  $region29: #{dqn_forward.1} parent=0 // pred_fallthru
    _
  %v27 = vld [vmem:[%s0] sm:$0xf]
  %v28 = vld [vmem:[%s1] sm:$0x3]
  %v29 = vld [vmem:[%s2] sm:$0x1]
  %v31 = vperm.slane %v29, 0
  %vm33 = vcmask 31744
  %v35 = vsel %vm33, %v27, 0
  %vm37 = vcmask 1041408
  %v39 = vsel %vm37, %v28, 0
  %41 = vmatpush.bf16.msra.mxu0 0
  %42 = vmatpush.bf16.msra.mxu0 0
  %43 = vmatpush.bf16.msra.mxu0 0
  %44 = vmatpush.bf16.msra.mxu0 0
  %45 = vmatpush.bf16.msra.mxu0 0
  %46 = vmatpush.bf16.msra.mxu0 0
  %47 = vmatpush.bf16.msra.mxu0 0
  %48 = vmatpush.bf16.msra.mxu0 %v39
  %49 = vmatmul.bf16.gmra.mxu0 %v35
  %v50 = vpop.f32.mrf.mxu0
  %v51 = vadd.f32 %v31, %v50
  %v52 = vpop.f32.mrf.mxu0
  %53 = vdwg.mxu0
  %v54 = vmax.f32 %v51, 0.0
  %v55 = vpack.c.bf16 %v54, %v54
  %v56 = vld [vmem:[%s3] sm:$0xf]
  %v57 = vld [vmem:[%s3 + $0x4] sm:$0xf]
  %v58 = vld [vmem:[%s3 + $0x8] sm:$0xf]
  %v59 = vld [vmem:[%s3 + $0xc] sm:$0xf]
  %v60 = vld [vmem:[%s3 + $0x10] sm:$0xf]
  %v61 = vld [vmem:[%s3 + $0x14] sm:$0xf]
  %v62 = vld [vmem:[%s3 + $0x18] sm:$0xf]
  %v63 = vld [vmem:[%s3 + $0x1c] sm:$0xf]
  %v64 = vld [vmem:[%s3 + $0x20] sm:$0xf]
  %v65 = vld [vmem:[%s3 + $0x24] sm:$0xf]
  %v66 = vld [vmem:[%s3 + $0x28] sm:$0xf]
  %v67 = vld [vmem:[%s3 + $0x2c] sm:$0xf]
  %v68 = vld [vmem:[%s3 + $0x30] sm:$0xf]
  %v69 = vld [vmem:[%s3 + $0x34] sm:$0xf]
  %v70 = vld [vmem:[%s3 + $0x38] sm:$0xf]
  %v71 = vld [vmem:[%s3 + $0x3c] sm:$0xf]
  %v72 = vld [vmem:[%s4] sm:$0x1]
  %v74 = vperm.slane %v72, 0
  %v92 = vunpack.c.l.b16 %v56
  %v93 = vunpack.c.l.b16 %v57
  %v94 = vunpack.c.l.b16 %v58
  %v95 = vunpack.c.l.b16 %v59
  %v96 = vunpack.c.l.b16 %v60
  %v97 = vunpack.c.l.b16 %v61
  %v98 = vunpack.c.l.b16 %v62
  %v99 = vunpack.c.l.b16 %v63
  %v100 = vunpack.c.l.b16 %v64
  %v101 = vunpack.c.l.b16 %v65
  %v102 = vunpack.c.l.b16 %v66
  %v103 = vunpack.c.l.b16 %v67
  %v104 = vunpack.c.l.b16 %v68
  %v105 = vunpack.c.l.b16 %v69
  %v106 = vunpack.c.l.b16 %v70
  %v107 = vunpack.c.l.b16 %v71
  %v108 = vpack.c.b16 %v93, %v92
  %v109 = vpack.c.b16 %v95, %v94
  %v110 = vpack.c.b16 %v97, %v96
  %v111 = vpack.c.b16 %v99, %v98
  %v112 = vpack.c.b16 %v101, %v100
  %v113 = vpack.c.b16 %v103, %v102
  %v114 = vpack.c.b16 %v105, %v104
  %v115 = vpack.c.b16 %v107, %v106
  %124 = vmatpush.bf16.msra.mxu0 %v115
  %125 = vmatpush.bf16.msra.mxu0 %v114
  %126 = vmatpush.bf16.msra.mxu0 %v113
  %127 = vmatpush.bf16.msra.mxu0 %v112
  %128 = vmatpush.bf16.msra.mxu0 %v111
  %129 = vmatpush.bf16.msra.mxu0 %v110
  %130 = vmatpush.bf16.msra.mxu0 %v109
  %131 = vmatpush.bf16.msra.mxu0 %v108
  %132 = vmatmul.bf16.gmra.mxu0 %v55
  %v133 = vpop.f32.mrf.mxu0
  %v134 = vadd.f32 %v74, %v133
  %v135 = vpop.f32.mrf.mxu0
  %136 = vdwg.mxu0
  %v137 = vmax.f32 %v134, 0.0
  %v138 = vpack.c.bf16 %v137, %v137
  %v139 = vld [vmem:[%s5] sm:$0xf]
  %v140 = vld [vmem:[%s5 + $0x4] sm:$0xf]
  %v141 = vld [vmem:[%s5 + $0x8] sm:$0xf]
  %v142 = vld [vmem:[%s5 + $0xc] sm:$0xf]
  %v143 = vld [vmem:[%s5 + $0x10] sm:$0xf]
  %v144 = vld [vmem:[%s5 + $0x14] sm:$0xf]
  %v145 = vld [vmem:[%s5 + $0x18] sm:$0xf]
  %v146 = vld [vmem:[%s5 + $0x1c] sm:$0xf]
  %v147 = vld [vmem:[%s5 + $0x20] sm:$0xf]
  %v148 = vld [vmem:[%s5 + $0x24] sm:$0xf]
  %v149 = vld [vmem:[%s5 + $0x28] sm:$0xf]
  %v150 = vld [vmem:[%s5 + $0x2c] sm:$0xf]
  %v151 = vld [vmem:[%s5 + $0x30] sm:$0xf]
  %v152 = vld [vmem:[%s5 + $0x34] sm:$0xf]
  %v153 = vld [vmem:[%s5 + $0x38] sm:$0xf]
  %v154 = vld [vmem:[%s5 + $0x3c] sm:$0xf]
  %v155 = vld [vmem:[%s6] sm:$0x1]
  %v157 = vperm.slane %v155, 0
  %v175 = vunpack.c.l.b16 %v139
  %v176 = vunpack.c.l.b16 %v140
  %v177 = vunpack.c.l.b16 %v141
  %v178 = vunpack.c.l.b16 %v142
  %v179 = vunpack.c.l.b16 %v143
  %v180 = vunpack.c.l.b16 %v144
  %v181 = vunpack.c.l.b16 %v145
  %v182 = vunpack.c.l.b16 %v146
  %v183 = vunpack.c.l.b16 %v147
  %v184 = vunpack.c.l.b16 %v148
  %v185 = vunpack.c.l.b16 %v149
  %v186 = vunpack.c.l.b16 %v150
  %v187 = vunpack.c.l.b16 %v151
  %v188 = vunpack.c.l.b16 %v152
  %v189 = vunpack.c.l.b16 %v153
  %v190 = vunpack.c.l.b16 %v154
  %v191 = vpack.c.b16 %v176, %v175
  %v192 = vpack.c.b16 %v178, %v177
  %v193 = vpack.c.b16 %v180, %v179
  %v194 = vpack.c.b16 %v182, %v181
  %v195 = vpack.c.b16 %v184, %v183
  %v196 = vpack.c.b16 %v186, %v185
  %v197 = vpack.c.b16 %v188, %v187
  %v198 = vpack.c.b16 %v190, %v189
  %207 = vmatpush.bf16.msra.mxu0 %v198
  %208 = vmatpush.bf16.msra.mxu0 %v197
  %209 = vmatpush.bf16.msra.mxu0 %v196
  %210 = vmatpush.bf16.msra.mxu0 %v195
  %211 = vmatpush.bf16.msra.mxu0 %v194
  %212 = vmatpush.bf16.msra.mxu0 %v193
  %213 = vmatpush.bf16.msra.mxu0 %v192
  %214 = vmatpush.bf16.msra.mxu0 %v191
  %215 = vmatmul.bf16.gmra.mxu0 %v138
  %v216 = vpop.f32.mrf.mxu0
  %v217 = vadd.f32 %v157, %v216
  %v218 = vpop.f32.mrf.mxu0
  %219 = vdwg.mxu0
  %220 = vst [vmem:[%s7] sm:$0xff] %v217
  // Predicated region
  $region30: #{dqn_forward.1} parent=0 // pred_check
    _
  $region31: #{dqn_forward.1} parent=0 // pred_check_branch
    %222 = sbr.rel (0) target = $region33
  $region32: #{dqn_forward.1} parent=0 // pred_region
    _
  $region33: #{dqn_forward.1} parent=0 // pred_fallthru
    _
  // Predicated region
  $region34: #{dqn_forward.1} parent=0 // pred_check
    _
  $region35: #{dqn_forward.1} parent=0 // pred_check_branch
    %224 = sbr.rel (0) target = $region37
  $region36: #{dqn_forward.1} parent=0 // pred_region
    _
  $region37: #{dqn_forward.1} parent=0 // pred_fallthru
    _

</llo_original>
